<compile_context>
chip_gen: v5e
topology: v5e:2x2
jax: 0.10.0
libtpu: 0.0.40
codegen_flags: <defaults>
</compile_context>

<pallas_src>
import functools

import jax
import jax.numpy as jnp
from jax.experimental import pallas as pl
from jax.experimental.pallas import tpu as pltpu


def _round_up(x: int, m: int) -> int:
    return (x + m - 1) // m * m


def _ldam_kernel(x_ref, t_ref, smt_ref, out_ref, *, scale: float,
                 batch: int, tb: int):
    i = pl.program_id(0)

    x = x_ref[...].astype(jnp.float32)       # (tb, C) logits, up-cast in VMEM
    t = t_ref[...]                           # (tb, 1) int32 targets
    smt = smt_ref[...]                       # (tb, 1) f32 scale*margins[target]

    # boolean one-hot mask of the target column (no f32 one-hot tile)
    col = jax.lax.broadcasted_iota(jnp.int32, x.shape, 1)
    mask = col == t                          # (tb, C) bool

    # z = scale*x - one_hot * (scale*margin[target]); margin applied only at
    # the target column via a select.
    z = scale * x - jnp.where(mask, smt, 0.0)

    # numerically stable cross-entropy, no materialized log-probs:
    #   ce = lse(z) - z[target] = lse(shifted) - shifted[target]
    row_max = jnp.max(z, axis=1, keepdims=True)
    shifted = z - row_max
    lse = jnp.log(jnp.sum(jnp.exp(shifted), axis=1, keepdims=True))
    tgt = jnp.sum(jnp.where(mask, shifted, 0.0), axis=1, keepdims=True)
    ce = lse - tgt                           # (tb, 1)

    # mask rows of the ragged last block (garbage / NaN safe: select, not mul)
    row = i * tb + jax.lax.broadcasted_iota(jnp.int32, ce.shape, 0)
    valid = row < batch
    out_ref[0, 0] = jnp.sum(jnp.where(valid, ce, 0.0))


class LDAMLossPallas:
    """JAX/Pallas port of the PyTorch LDAMLoss module (forward pass)."""

    def __init__(self, class_counts, max_margin: float = 0.5,
                 scale: float = 30.0):
        counts = jnp.asarray(class_counts, dtype=jnp.float32)
        margins = max_margin * (1.0 - jnp.sqrt(counts / jnp.max(counts)))
        self.margins = margins.astype(jnp.float32)   # (C,)
        self.scale = float(scale)

    def __call__(self, inputs: jnp.ndarray, targets: jnp.ndarray,
                 *, block_rows: int | None = None) -> jnp.ndarray:
        assert inputs.ndim == 2, "inputs must be (batch, n_classes)"
        B, C = inputs.shape
        itemsize = jnp.dtype(inputs.dtype).itemsize
        c_lanes = _round_up(C, 128)          # VMEM-footprint estimate only

        # Batch tile: size off the in-kernel f32 working set (~4 MiB / tile),
        # multiple of 8 sublanes, never larger than the (rounded) batch.
        if block_rows is None:
            tile_f32_budget = 4 * 1024 * 1024
            tb = tile_f32_budget // (c_lanes * 4)
        else:
            tb = int(block_rows)
        tb = min(tb, _round_up(B, 8), 4096)
        tb = max(8, (tb // 8) * 8)
        nb = pl.cdiv(B, tb)                  # ragged last block, masked in-kernel

        # Per-row scale*margins[target]: trivial gather in XLA, streamed to
        # the kernel so no resident margins tile / cross-lane gather is needed.
        t = targets.astype(jnp.int32)
        smt = (self.scale * jnp.take(self.margins, t)).astype(jnp.float32)
        t2 = t.reshape(B, 1)
        smt2 = smt.reshape(B, 1)

        kernel = functools.partial(
            _ldam_kernel, scale=self.scale, batch=B, tb=tb)

        partials = pl.pallas_call(
            kernel,
            out_shape=jax.ShapeDtypeStruct((nb, 1), jnp.float32),
            grid_spec=pltpu.PrefetchScalarGridSpec(
                num_scalar_prefetch=0,
                grid=(nb,),
                in_specs=[
                    # logits: batch-tiled, full class axis (no pad copy in HBM)
                    pl.BlockSpec((tb, C), lambda i: (i, 0)),
                    # targets / per-row scaled margins: matching batch tiles
                    pl.BlockSpec((tb, 1), lambda i: (i, 0)),
                    pl.BlockSpec((tb, 1), lambda i: (i, 0)),
                ],
                # one independent SMEM scalar per block -> "parallel" grid axis
                # (v7x dual-TC splits batch blocks); final mean done in XLA.
                out_specs=pl.BlockSpec(
                    (1, 1), lambda i: (i, 0),
                    memory_space=pltpu.MemorySpace.SMEM),
            ),
            compiler_params=pltpu.CompilerParams(
                dimension_semantics=("parallel",),
                vmem_limit_bytes=48 * 1024 * 1024),
            cost_estimate=pl.CostEstimate(
                flops=6 * B * C,
                transcendentals=B * C + B,
                bytes_accessed=B * C * itemsize + B * 8 + nb * 4),
        )(inputs, t2, smt2)

        return jnp.sum(partials) * (1.0 / B)


def _reference_ldam(inputs, targets, margins, scale):
    """Pure-JAX reference matching the PyTorch LDAMLoss forward."""
    x = inputs.astype(jnp.float32)
    t = targets.astype(jnp.int32)
    bm = margins[t]                                               # (B,)
    onehot = jax.nn.one_hot(t, x.shape[1], dtype=jnp.float32)     # (B, C)
    z = scale * (x - onehot * bm[:, None])
    logp = jax.nn.log_softmax(z, axis=1)
    ce = -jnp.take_along_axis(logp, t[:, None], axis=1)[:, 0]
    return jnp.mean(ce)


if __name__ == "__main__":
    key = jax.random.PRNGKey(0)
    ok = True

    # --- test 1: f32 logits, C < 128, B not a multiple of the tile ---
    B, C = 10, 5
    class_counts = [100, 10, 50, 5, 30]
    key, k1, k2 = jax.random.split(key, 3)
    logits = jax.random.normal(k1, (B, C), dtype=jnp.float32)
    targets = jax.random.randint(k2, (B,), 0, C, dtype=jnp.int32)

    mod = LDAMLossPallas(class_counts, max_margin=0.5, scale=30.0)
    out = jax.block_until_ready(mod(logits, targets))
    ref = _reference_ldam(logits, targets, mod.margins, mod.scale)
    if not jnp.allclose(out, ref, rtol=1e-5, atol=1e-5):
        ok = False
        print(f"MISMATCH (f32, small C): kernel={out} ref={ref}")

    # --- test 2: bf16 logits, C > 128, multi-block grid with ragged last block ---
    B, C = 40, 200
    class_counts = [int(5 + 7 * i) for i in range(1, C + 1)]
    key, k1, k2 = jax.random.split(key, 3)
    logits = jax.random.normal(k1, (B, C), dtype=jnp.bfloat16)
    targets = jax.random.randint(k2, (B,), 0, C, dtype=jnp.int32)

    mod = LDAMLossPallas(class_counts, max_margin=0.5, scale=30.0)
    out = jax.block_until_ready(mod(logits, targets, block_rows=16))  # nb=3
    ref = _reference_ldam(logits, targets, mod.margins, mod.scale)
    if not jnp.allclose(out, ref, rtol=1e-5, atol=1e-4):
        ok = False
        print(f"MISMATCH (bf16, multi-block): kernel={out} ref={ref}")

    if ok:
        print("KERNEL_OK")
</pallas_src>

<mosaic_0001>
module attributes {stable_mosaic.version = 11 : i64} {
  func.func @_ldam_kernel(%arg0: i32, %arg1: memref<16x5xf32, #tpu.memory_space<vmem>>, %arg2: memref<16x1xi32, #tpu.memory_space<vmem>>, %arg3: memref<16x1xf32, #tpu.memory_space<vmem>>, %arg4: memref<1x1xf32, #tpu.memory_space<smem>>) attributes {dimension_semantics = [#tpu.dimension_semantics<parallel>], iteration_bounds = array<i64: 1>, scalar_prefetch = 0 : i64, scratch_operands = 0 : i64, tpu.core_type = #tpu.core_type<tc>, window_params = [{transform_indices = @transform_0, window_bounds = array<i64: 16, 5>}, {transform_indices = @transform_1, window_bounds = array<i64: 16, 1>}, {transform_indices = @transform_2, window_bounds = array<i64: 16, 1>}, {transform_indices = @transform_3, window_bounds = array<i64: 1, 1>}]} {
    %c0 = arith.constant 0 : index
    %c0_0 = arith.constant 0 : index
    %0 = vector.load %arg1[%c0, %c0_0] : memref<16x5xf32, #tpu.memory_space<vmem>>, vector<16x5xf32>
    %c0_1 = arith.constant 0 : index
    %c0_2 = arith.constant 0 : index
    %1 = vector.load %arg2[%c0_1, %c0_2] : memref<16x1xi32, #tpu.memory_space<vmem>>, vector<16x1xi32>
    %c0_3 = arith.constant 0 : index
    %c0_4 = arith.constant 0 : index
    %2 = vector.load %arg3[%c0_3, %c0_4] : memref<16x1xf32, #tpu.memory_space<vmem>>, vector<16x1xf32>
    %3 = tpu.iota {dimensions = array<i32: 1>} : vector<16x5xi32>
    %4 = vector.broadcast %1 : vector<16x1xi32> to vector<16x5xi32>
    %5 = arith.cmpi eq, %3, %4 : vector<16x5xi32>
    %cst = arith.constant 3.000000e+01 : f32
    %6 = vector.broadcast %cst : f32 to vector<16x5xf32>
    %7 = arith.mulf %6, %0 : vector<16x5xf32>
    %cst_5 = arith.constant 0.000000e+00 : f32
    %8 = vector.shape_cast %2 : vector<16x1xf32> to vector<16x1xf32>
    %9 = vector.broadcast %8 : vector<16x1xf32> to vector<16x5xf32>
    %10 = vector.broadcast %cst_5 : f32 to vector<16x5xf32>
    %11 = arith.select %5, %9, %10 : vector<16x5xi1>, vector<16x5xf32>
    %12 = arith.subf %7, %11 : vector<16x5xf32>
    %cst_6 = arith.constant dense<0xFF800000> : vector<16xf32>
    %13 = vector.multi_reduction <maximumf>, %12, %cst_6 [1] : vector<16x5xf32> to vector<16xf32>
    %14 = vector.shape_cast %13 : vector<16xf32> to vector<16x1xf32>
    %15 = vector.broadcast %14 : vector<16x1xf32> to vector<16x5xf32>
    %16 = arith.subf %12, %15 : vector<16x5xf32>
    %17 = math.exp %16 : vector<16x5xf32>
    %cst_7 = arith.constant dense<0.000000e+00> : vector<16xf32>
    %18 = vector.multi_reduction <add>, %17, %cst_7 [1] : vector<16x5xf32> to vector<16xf32>
    %19 = vector.shape_cast %18 : vector<16xf32> to vector<16x1xf32>
    %20 = math.log %19 : vector<16x1xf32>
    %cst_8 = arith.constant 0.000000e+00 : f32
    %21 = vector.broadcast %cst_8 : f32 to vector<16x5xf32>
    %22 = arith.select %5, %16, %21 : vector<16x5xi1>, vector<16x5xf32>
    %cst_9 = arith.constant dense<0.000000e+00> : vector<16xf32>
    %23 = vector.multi_reduction <add>, %22, %cst_9 [1] : vector<16x5xf32> to vector<16xf32>
    %24 = vector.shape_cast %23 : vector<16xf32> to vector<16x1xf32>
    %25 = arith.subf %20, %24 : vector<16x1xf32>
    %c16_i32 = arith.constant 16 : i32
    %26 = arith.muli %arg0, %c16_i32 : i32
    %27 = tpu.iota {dimensions = array<i32: 0>} : vector<16x1xi32>
    %28 = vector.broadcast %26 : i32 to vector<16x1xi32>
    %29 = arith.addi %28, %27 : vector<16x1xi32>
    %c10_i32 = arith.constant 10 : i32
    %30 = vector.broadcast %c10_i32 : i32 to vector<16x1xi32>
    %31 = arith.cmpi slt, %29, %30 : vector<16x1xi32>
    %cst_10 = arith.constant 0.000000e+00 : f32
    %32 = vector.broadcast %cst_10 : f32 to vector<16x1xf32>
    %33 = arith.select %31, %25, %32 : vector<16x1xi1>, vector<16x1xf32>
    %34 = vector.shape_cast %33 : vector<16x1xf32> to vector<1x16x1xf32>
    %cst_11 = arith.constant dense<0.000000e+00> : vector<1xf32>
    %35 = vector.multi_reduction <add>, %34, %cst_11 [1, 2] : vector<1x16x1xf32> to vector<1xf32>
    %36 = vector.shape_cast %35 : vector<1xf32> to vector<1x1x1xf32>
    %37 = vector.extract %36[0, 0, 0] : f32 from vector<1x1x1xf32>
    %c0_12 = arith.constant 0 : index
    %c0_13 = arith.constant 0 : index
    %38 = memref.load %arg4[%c0_12, %c0_13] : memref<1x1xf32, #tpu.memory_space<smem>>
    memref.store %37, %arg4[%c0_12, %c0_13] : memref<1x1xf32, #tpu.memory_space<smem>>
    return
  }
  func.func @transform_0(%arg0: i32) -> (i32, i32) {
    %c0_i32 = arith.constant 0 : i32
    %c0_i32_0 = arith.constant 0 : i32
    return %arg0, %c0_i32 : i32, i32
  }
  func.func @transform_1(%arg0: i32) -> (i32, i32) {
    %c0_i32 = arith.constant 0 : i32
    %c0_i32_0 = arith.constant 0 : i32
    return %arg0, %c0_i32 : i32, i32
  }
  func.func @transform_2(%arg0: i32) -> (i32, i32) {
    %c0_i32 = arith.constant 0 : i32
    %c0_i32_0 = arith.constant 0 : i32
    return %arg0, %c0_i32 : i32, i32
  }
  func.func @transform_3(%arg0: i32) -> (i32, i32) {
    %c0_i32 = arith.constant 0 : i32
    %c0_i32_0 = arith.constant 0 : i32
    return %arg0, %c0_i32 : i32, i32
  }
}

</mosaic_0001>

<llo_original>
// kernel: tpu_custom_call.1
$region0: #{tpu_custom_call.1}
  #allocation0 [shape = 'u32[]', space=smem, size = 0x4, offset = 0x4, fixed_abs, tag = 'smem constant byte address 0x4 - core index']
  #allocation1 [shape = 'u32[72,128]{1,0:T(1,128)}', space=vmem, size = 0x9000, scoped, tag = 'internal scratch']
  %s0 = inlined_call_operand.vmem [shape: f32[10,5], index: 0, kind: input, shape index: {}]
  %s1 = inlined_call_operand.vmem [shape: s32[10,1], index: 1, kind: input, shape index: {}]
  %s2 = inlined_call_operand.vmem [shape: f32[10,1], index: 2, kind: input, shape index: {}]
  %s3 = inlined_call_operand.hbm [shape: f32[1,1], index: 3, kind: output, shape index: {}]
  %s4 = sld [smem:[#allocation0]]
  $region22: #{tpu_custom_call.1} parent=0
    _
  %s6 = ssub.s32 1, %s4
  %s7 = scalar_select 0, %s6, %s4
  $region1: #{tpu_custom_call.1} parent=0
    #allocation2 [shape = 'u8[512]{0}', space=smem, size = 0x200, scoped, tag = 'output window, operand 0, single buffered']
    #allocation3 [shape = 's32[1]{0}', space=sflag, size = 0x4, scoped, tag = 'scoped memory for tpu_custom_call.1']
    %8 = vsyncpa [#allocation3], 0
    // Predicated region
    $region2: #{tpu_custom_call.1} parent=1 // pred_check
      _
    $region3: #{tpu_custom_call.1} parent=1 // pred_check_branch
      %10 = sbr.rel (0) target = $region5
    $region4: #{tpu_custom_call.1} parent=1 // pred_region
      _
    $region5: #{tpu_custom_call.1} parent=1 // pred_fallthru
      _
    // Predicated region
    $region6: #{tpu_custom_call.1} parent=1 // pred_check
      _
    $region7: #{tpu_custom_call.1} parent=1 // pred_check_branch
      %12 = sbr.rel (0) target = $region9
    $region8: #{tpu_custom_call.1} parent=1 // pred_region
      _
    $region9: #{tpu_custom_call.1} parent=1 // pred_fallthru
      _
    // Predicated region
    $region10: #{tpu_custom_call.1} parent=1 // pred_check
      _
    $region11: #{tpu_custom_call.1} parent=1 // pred_check_branch
      %14 = sbr.rel (0) target = $region13
    $region12: #{tpu_custom_call.1} parent=1 // pred_region
      _
    $region13: #{tpu_custom_call.1} parent=1 // pred_fallthru
      _
    %v15 = vld [vmem:[%s0] sm:$0xff]
    %v16 = vld [vmem:[%s0 + $0x8] sm:$0xff]
    %v17 = vld [vmem:[%s1] sm:$0xff]
    %v18 = vld [vmem:[%s1 + $0x8] sm:$0xff]
    %v19 = vld [vmem:[%s2] sm:$0xff]
    %v20 = vld [vmem:[%s2 + $0x8] sm:$0xff]
    %v21 = vlaneseq
    %v22 = vand.u32 %v21, 127
    %23 = vset.pattern.permute.xlu0 0
    %24 = vperm.xlu0 %23, %v17
    %v25 = vpop.permute.xlu0 %24
    %26 = vset.pattern.permute.xlu0 0
    %27 = vperm.xlu0 %26, %v18
    %v28 = vpop.permute.xlu0 %27
    %vm29 = vcmp.eq.s32.totalorder %v22, %v25
    %vm30 = vcmp.eq.s32.totalorder %v22, %v28
    %v31 = vmul.f32 %v15, 30.0
    %v32 = vmul.f32 %v16, 30.0
    %34 = vset.pattern.permute.xlu0 0
    %35 = vperm.xlu0 %34, %v19
    %v36 = vpop.permute.xlu0 %35
    %39 = vset.pattern.permute.xlu0 0
    %40 = vperm.xlu0 %39, %v20
    %v41 = vpop.permute.xlu0 %40
    %v43 = vsel %vm29, %v36, 0.0
    %v44 = vsel %vm30, %v41, 0.0
    %v45 = vsub.f32 %v31, %v43
    %v46 = vsub.f32 %v32, %v44
    %vm47 = vcmask 39936
    %v48 = vsel %vm47, %v45, -inf
    %49 = vmax.xlane.f32.xlu0 %v48
    %v50 = vpop.xlane.xlu0 %49
    %v51 = vsel %vm47, %v46, -inf
    %52 = vmax.xlane.f32.xlu0 %v51
    %v53 = vpop.xlane.xlu0 %52
    %v54 = vsub.f32 %v45, %v50
    %v55 = vsub.f32 %v46, %v53
    %v56 = vmul.f32 %v54, 1.442695
    %v57 = vpow.pop %v56
    %v58 = vmul.f32 %v55, 1.442695
    %v59 = vpow.pop %v58
    %v60 = vsel %vm47, %v57, 0.0
    %61 = vadd.xlane.f32.xlu0 %v60
    %v62 = vpop.xlane.xlu0 %61
    %v63 = vsel %vm47, %v59, 0.0
    %64 = vadd.xlane.f32.xlu0 %v63
    %v65 = vpop.xlane.xlu0 %64
    %v66 = vlog2.pop %v62
    %v67 = vmul.f32 %v66, 0.6931472
    %v68 = vlog2.pop %v65
    %v69 = vmul.f32 %v68, 0.6931472
    %v70 = vsel %vm29, %v54, 0.0
    %v71 = vsel %vm30, %v55, 0.0
    %v72 = vsel %vm47, %v70, 0.0
    %73 = vadd.xlane.f32.xlu0 %v72
    %v74 = vpop.xlane.xlu0 %73
    %v75 = vsel %vm47, %v71, 0.0
    %76 = vadd.xlane.f32.xlu0 %v75
    %v77 = vpop.xlane.xlu0 %76
    %v78 = vsub.f32 %v67, %v74
    %v79 = vsub.f32 %v69, %v77
    %s80 = smul.u32 0, 16
    %v81 = vlaneseq
    %v82 = vshrl.u32 %v81, 7
    %v83 = vadd.s32 %v82, 8
    %v84 = vstv %s80
    %v85 = vadd.s32 %v84, %v82
    %v86 = vadd.s32 %v84, %v83
    %vm87 = vcmp.lt.s32.totalorder %v85, 10
    %vm88 = vcmp.lt.s32.totalorder %v86, 10
    %v89 = vsel %vm87, %v78, 0.0
    %v90 = vsel %vm88, %v79, 0.0
    %vm91 = vcmask 7168
    %v92 = vsel %vm91, %v89, 0.0
    %v93 = vsel %vm91, %v90, 0.0
    %v94 = vadd.f32 %v92, %v93
    %95 = vadd.xlane.f32.xlu0 %v94
    %v96 = vpop.xlane.xlu0 %95
    %v97 = vrot.slane %v96, 4
    %v98 = vadd.f32 %v96, %v97
    %v99 = vrot.slane %v98, 2
    %v100 = vadd.f32 %v98, %v99
    %v101 = vrot.slane %v100, 1
    %v102 = vadd.f32 %v100, %v101
    %s103 = vtos %v102
    %s104 = scalar_lea.smem [#allocation2], 0
    %105 = sst [smem:[%s104]] %s103
    // Predicated region
    $region14: #{tpu_custom_call.1} parent=1 // pred_check
      _
    $region15: #{tpu_custom_call.1} parent=1 // pred_check_branch
      %107 = sbr.rel (0) target = $region17
    $region16: #{tpu_custom_call.1} parent=1 // pred_region
      %109 = vsyncadd [#allocation3], 0
      %s111 = sshll.u32 %s3, 4
      %s112 = int_to_ptr.hbm [resolvable:$true] %s111
      %114 = dma.smem_to_hbm [#allocation2], 16, %s112, [#allocation3]
    $region17: #{tpu_custom_call.1} parent=1 // pred_fallthru
      _
    // Predicated region
    $region18: #{tpu_custom_call.1} parent=1 // pred_check
      _
    $region19: #{tpu_custom_call.1} parent=1 // pred_check_branch
      %116 = sbr.rel (0) target = $region21
    $region20: #{tpu_custom_call.1} parent=1 // pred_region
      %118 = dma.done [#allocation3], 16
    $region21: #{tpu_custom_call.1} parent=1 // pred_fallthru
      _
    %119 = sfence
    %120 = vsyncpa [#allocation3], 1

</llo_original>
